<compile_context>
chip_gen: v7x
topology: tpu7x:2x2x1
jax: 0.10.0
libtpu: 0.0.40
codegen_flags: <defaults>
</compile_context>

<pallas_src>
import jax
import jax.numpy as jnp
from jax.experimental import pallas as pl
from jax.experimental.pallas import tpu as pltpu


def _make_conv_kernel(C_out, K, L_out, tap_offsets):
    """Shifted-FMA 1D conv + bias + ReLU, lane-dense flattened output.

    x_ref : (TN, W_in)          VMEM  tap k == x_ref[:, off_k : off_k + L_out]
    w_ref : (C_out, K)          SMEM  per-channel scalar taps
    b_ref : (C_out,)            SMEM
    o_ref : (TN, C_out * L_out) VMEM  already in nn.Flatten(start_dim=1) order
    """

    def kernel(x_ref, w_ref, b_ref, o_ref):
        # Load each tap once; reused across all output channels.
        taps = [x_ref[:, off:off + L_out] for off in tap_offsets]
        for c in range(C_out):
            # Fold bias into the first FMA (no zero-vreg materialization).
            acc = taps[0] * w_ref[c, 0] + b_ref[c]
            for k in range(1, K):
                acc = acc + w_ref[c, k] * taps[k]
            # ReLU activation; Dropout is identity in eval mode.
            # Contiguous lane-range store into the flattened output layout.
            o_ref[:, c * L_out:(c + 1) * L_out] = (
                jnp.maximum(acc, 0.0).astype(o_ref.dtype))

    return kernel


def _choose_row_tile(N, in_width, out_width, itemsize):
    """Largest sublane-aligned row tile whose double-buffered working set stays
    well inside the smallest per-generation VMEM budget (v7x: 64 MiB physical),
    while guaranteeing >= 2 grid tiles when the batch allows it (v7x has 2 TCs)."""
    per_row = max((in_width + out_width) * itemsize, 1)
    budget = 12 * 1024 * 1024           # per-buffer target; 2x(in+out) <= ~24 MiB
    tn = (budget // per_row) // 8 * 8
    tn = max(8, min(1024, tn))
    if N >= 16:
        half = (((N + 1) // 2) + 7) // 8 * 8   # cdiv(N, 2) rounded up to 8
        return min(tn, half)
    # Tiny batch: a single full-rows block (a full-dim sublane block is legal).
    return N


def conv_net_forward(x, weight, bias, *, kernel_size, padding, stride,
                     out_dtype=None, interpret=False):
    """Forward pass of convNet.

    x      : (N, 1, L)      float32, PyTorch NCL layout
    weight : (C_out, 1, K)  float32
    bias   : (C_out,)       float32
    returns (N, C_out * L_out) in out_dtype (default x.dtype); this is already
    the nn.Flatten(start_dim=1) layout, no post-kernel reshape needed.
    """
    N, c_in, L = x.shape
    assert c_in == 1, "convNet uses in_channels=1"
    C_out = weight.shape[0]
    K = int(kernel_size)
    S = int(stride)
    P = int(padding)
    L_out = (L + 2 * P - K) // S + 1
    assert L_out > 0, "invalid conv geometry"
    out_dtype = x.dtype if out_dtype is None else out_dtype

    # ---- single cheap wrapper pass over the input --------------------------
    # stride == 1: just the (P, P) column halo.
    # stride  > 1: halo + de-interleave lanes by residue class (mod stride) so
    #              every in-kernel tap is a *contiguous* lane slice.
    x2d = x[:, 0, :]
    x_pad = jnp.pad(x2d, ((0, 0), (P, P)))                     # (N, L + 2P)
    L_pad = L + 2 * P
    if S == 1:
        L_res = L_pad
        x_in = x_pad                                           # (N, L_pad)
    else:
        L_res = (L_pad + S - 1) // S                           # lanes per residue
        x_r = jnp.pad(x_pad, ((0, 0), (0, L_res * S - L_pad)))
        # x_in[n, r * L_res + m] == x_pad[n, m * S + r]
        x_in = x_r.reshape(N, L_res, S).transpose(0, 2, 1).reshape(N, S * L_res)
    in_width = x_in.shape[1]
    out_width = C_out * L_out
    # tap k: x_pad[:, j*S + k] == x_in[:, (k % S) * L_res + (k // S) + j]
    tap_offsets = tuple((k % S) * L_res + (k // S) for k in range(K))

    # ---- batch-row tiling (no batch padding; ragged last tile is fine) -----
    itemsize = jnp.dtype(x.dtype).itemsize
    TN = _choose_row_tile(N, in_width, out_width, itemsize)
    num_tiles = (N + TN - 1) // TN
    per_row_bytes = (in_width + out_width) * itemsize
    vmem_limit = int(min(56 * 2**20, max(16 * 2**20, 3 * TN * per_row_bytes)))

    out = pl.pallas_call(
        _make_conv_kernel(C_out, K, L_out, tap_offsets),
        out_shape=jax.ShapeDtypeStruct((N, out_width), out_dtype),
        grid=(num_tiles,),
        in_specs=[
            pl.BlockSpec((TN, in_width), lambda i: (i, 0)),
            pl.BlockSpec(memory_space=pltpu.MemorySpace.SMEM),   # weights (C_out, K)
            pl.BlockSpec(memory_space=pltpu.MemorySpace.SMEM),   # bias    (C_out,)
        ],
        out_specs=pl.BlockSpec((TN, out_width), lambda i: (i, 0)),
        compiler_params=pltpu.CompilerParams(
            dimension_semantics=("parallel",),
            vmem_limit_bytes=vmem_limit,
        ),
        interpret=interpret,
    )(x_in, weight[:, 0, :], bias)

    # TODO(synk): nn.Dropout is identity in eval mode; training-mode stochastic
    # masking (pltpu.prng_seed / prng_random_bits) not implemented here.

    # Output already matches nn.Flatten(start_dim=1); no reshape / slice needed.
    return out


def _reference(x, weight, bias, *, padding, stride):
    conv = jax.lax.conv_general_dilated(
        x, weight, window_strides=(stride,), padding=[(padding, padding)],
        dimension_numbers=("NCH", "OIH", "NCH"),
    ) + bias[None, :, None]
    act = jnp.maximum(conv, 0.0)
    return act.reshape(act.shape[0], -1)


if __name__ == "__main__":
    key = jax.random.PRNGKey(0)

    # (N, L, C_out, K, padding, stride)
    configs = [
        (2, 16, 4, 3, 1, 1),     # original tiny convNet instantiation
        (32, 256, 4, 5, 2, 1),   # stride=1, multi-tile grid
        (36, 128, 4, 3, 1, 1),   # ragged last batch tile (no batch padding)
        (24, 100, 6, 5, 2, 2),   # stride=2 (residue-deinterleaved taps), ragged tile
    ]

    for (N, L, C_out, K, padding, stride) in configs:
        key, k_x, k_w, k_b = jax.random.split(key, 4)
        x = jax.random.normal(k_x, (N, 1, L), dtype=jnp.float32)
        weight = jax.random.normal(k_w, (C_out, 1, K), dtype=jnp.float32) * 0.1
        bias = jax.random.normal(k_b, (C_out,), dtype=jnp.float32) * 0.1

        out = conv_net_forward(x, weight, bias, kernel_size=K,
                               padding=padding, stride=stride)
        out = jax.block_until_ready(out)

        ref = _reference(x, weight, bias, padding=padding, stride=stride)
        L_out = (L + 2 * padding - K) // stride + 1
        assert out.shape == (N, C_out * L_out), (out.shape, (N, C_out * L_out))
        assert jnp.allclose(out, ref, atol=1e-5, rtol=1e-5), (
            f"mismatch for config N={N} L={L} C={C_out} K={K} P={padding} S={stride}"
        )

    print("KERNEL_OK")
</pallas_src>

<mosaic_0001>
module attributes {stable_mosaic.version = 11 : i64} {
  func.func @kernel(%arg0: i32, %arg1: memref<2x18xf32, #tpu.memory_space<vmem>>, %arg2: memref<4x3xf32, #tpu.memory_space<smem>>, %arg3: memref<4xf32, #tpu.memory_space<smem>>, %arg4: memref<2x64xf32, #tpu.memory_space<vmem>>) attributes {dimension_semantics = [#tpu.dimension_semantics<parallel>], iteration_bounds = array<i64: 1>, scalar_prefetch = 0 : i64, scratch_operands = 0 : i64, tpu.core_type = #tpu.core_type<tc>, window_params = [{transform_indices = @transform_0, window_bounds = array<i64: 2, 18>}, {transform_indices = @transform_1, window_bounds = array<i64: 4, 3>}, {transform_indices = @transform_2, window_bounds = array<i64: 4>}, {transform_indices = @transform_3, window_bounds = array<i64: 2, 64>}]} {
    %c0 = arith.constant 0 : index
    %c0_0 = arith.constant 0 : index
    %0 = vector.load %arg1[%c0, %c0_0] : memref<2x18xf32, #tpu.memory_space<vmem>>, vector<2x16xf32>
    %c0_1 = arith.constant 0 : index
    %c1 = arith.constant 1 : index
    %1 = vector.load %arg1[%c0_1, %c1] : memref<2x18xf32, #tpu.memory_space<vmem>>, vector<2x16xf32>
    %c0_2 = arith.constant 0 : index
    %c2 = arith.constant 2 : index
    %2 = vector.load %arg1[%c0_2, %c2] : memref<2x18xf32, #tpu.memory_space<vmem>>, vector<2x16xf32>
    %c0_3 = arith.constant 0 : index
    %c0_4 = arith.constant 0 : index
    %3 = memref.load %arg2[%c0_3, %c0_4] : memref<4x3xf32, #tpu.memory_space<smem>>
    %4 = vector.broadcast %3 : f32 to vector<2x16xf32>
    %5 = arith.mulf %0, %4 : vector<2x16xf32>
    %c0_5 = arith.constant 0 : index
    %6 = memref.load %arg3[%c0_5] : memref<4xf32, #tpu.memory_space<smem>>
    %7 = vector.broadcast %6 : f32 to vector<2x16xf32>
    %8 = arith.addf %5, %7 : vector<2x16xf32>
    %c0_6 = arith.constant 0 : index
    %c1_7 = arith.constant 1 : index
    %9 = memref.load %arg2[%c0_6, %c1_7] : memref<4x3xf32, #tpu.memory_space<smem>>
    %10 = vector.broadcast %9 : f32 to vector<2x16xf32>
    %11 = arith.mulf %10, %1 : vector<2x16xf32>
    %12 = arith.addf %8, %11 : vector<2x16xf32>
    %c0_8 = arith.constant 0 : index
    %c2_9 = arith.constant 2 : index
    %13 = memref.load %arg2[%c0_8, %c2_9] : memref<4x3xf32, #tpu.memory_space<smem>>
    %14 = vector.broadcast %13 : f32 to vector<2x16xf32>
    %15 = arith.mulf %14, %2 : vector<2x16xf32>
    %16 = arith.addf %12, %15 : vector<2x16xf32>
    %cst = arith.constant 0.000000e+00 : f32
    %17 = vector.broadcast %cst : f32 to vector<2x16xf32>
    %18 = arith.maximumf %16, %17 : vector<2x16xf32>
    %c0_10 = arith.constant 0 : index
    %c0_11 = arith.constant 0 : index
    %19 = vector.load %arg4[%c0_10, %c0_11] : memref<2x64xf32, #tpu.memory_space<vmem>>, vector<2x16xf32>
    tpu.vector_store %arg4[%c0_10, %c0_11], %18 {strides = array<i32>} : memref<2x64xf32, #tpu.memory_space<vmem>>, vector<2x16xf32>,
    %c1_12 = arith.constant 1 : index
    %c0_13 = arith.constant 0 : index
    %20 = memref.load %arg2[%c1_12, %c0_13] : memref<4x3xf32, #tpu.memory_space<smem>>
    %21 = vector.broadcast %20 : f32 to vector<2x16xf32>
    %22 = arith.mulf %0, %21 : vector<2x16xf32>
    %c1_14 = arith.constant 1 : index
    %23 = memref.load %arg3[%c1_14] : memref<4xf32, #tpu.memory_space<smem>>
    %24 = vector.broadcast %23 : f32 to vector<2x16xf32>
    %25 = arith.addf %22, %24 : vector<2x16xf32>
    %c1_15 = arith.constant 1 : index
    %c1_16 = arith.constant 1 : index
    %26 = memref.load %arg2[%c1_15, %c1_16] : memref<4x3xf32, #tpu.memory_space<smem>>
    %27 = vector.broadcast %26 : f32 to vector<2x16xf32>
    %28 = arith.mulf %27, %1 : vector<2x16xf32>
    %29 = arith.addf %25, %28 : vector<2x16xf32>
    %c1_17 = arith.constant 1 : index
    %c2_18 = arith.constant 2 : index
    %30 = memref.load %arg2[%c1_17, %c2_18] : memref<4x3xf32, #tpu.memory_space<smem>>
    %31 = vector.broadcast %30 : f32 to vector<2x16xf32>
    %32 = arith.mulf %31, %2 : vector<2x16xf32>
    %33 = arith.addf %29, %32 : vector<2x16xf32>
    %cst_19 = arith.constant 0.000000e+00 : f32
    %34 = vector.broadcast %cst_19 : f32 to vector<2x16xf32>
    %35 = arith.maximumf %33, %34 : vector<2x16xf32>
    %c0_20 = arith.constant 0 : index
    %c16 = arith.constant 16 : index
    %36 = vector.load %arg4[%c0_20, %c16] : memref<2x64xf32, #tpu.memory_space<vmem>>, vector<2x16xf32>
    tpu.vector_store %arg4[%c0_20, %c16], %35 {strides = array<i32>} : memref<2x64xf32, #tpu.memory_space<vmem>>, vector<2x16xf32>,
    %c2_21 = arith.constant 2 : index
    %c0_22 = arith.constant 0 : index
    %37 = memref.load %arg2[%c2_21, %c0_22] : memref<4x3xf32, #tpu.memory_space<smem>>
    %38 = vector.broadcast %37 : f32 to vector<2x16xf32>
    %39 = arith.mulf %0, %38 : vector<2x16xf32>
    %c2_23 = arith.constant 2 : index
    %40 = memref.load %arg3[%c2_23] : memref<4xf32, #tpu.memory_space<smem>>
    %41 = vector.broadcast %40 : f32 to vector<2x16xf32>
    %42 = arith.addf %39, %41 : vector<2x16xf32>
    %c2_24 = arith.constant 2 : index
    %c1_25 = arith.constant 1 : index
    %43 = memref.load %arg2[%c2_24, %c1_25] : memref<4x3xf32, #tpu.memory_space<smem>>
    %44 = vector.broadcast %43 : f32 to vector<2x16xf32>
    %45 = arith.mulf %44, %1 : vector<2x16xf32>
    %46 = arith.addf %42, %45 : vector<2x16xf32>
    %c2_26 = arith.constant 2 : index
    %c2_27 = arith.constant 2 : index
    %47 = memref.load %arg2[%c2_26, %c2_27] : memref<4x3xf32, #tpu.memory_space<smem>>
    %48 = vector.broadcast %47 : f32 to vector<2x16xf32>
    %49 = arith.mulf %48, %2 : vector<2x16xf32>
    %50 = arith.addf %46, %49 : vector<2x16xf32>
    %cst_28 = arith.constant 0.000000e+00 : f32
    %51 = vector.broadcast %cst_28 : f32 to vector<2x16xf32>
    %52 = arith.maximumf %50, %51 : vector<2x16xf32>
    %c0_29 = arith.constant 0 : index
    %c32 = arith.constant 32 : index
    %53 = vector.load %arg4[%c0_29, %c32] : memref<2x64xf32, #tpu.memory_space<vmem>>, vector<2x16xf32>
    tpu.vector_store %arg4[%c0_29, %c32], %52 {strides = array<i32>} : memref<2x64xf32, #tpu.memory_space<vmem>>, vector<2x16xf32>,
    %c3 = arith.constant 3 : index
    %c0_30 = arith.constant 0 : index
    %54 = memref.load %arg2[%c3, %c0_30] : memref<4x3xf32, #tpu.memory_space<smem>>
    %55 = vector.broadcast %54 : f32 to vector<2x16xf32>
    %56 = arith.mulf %0, %55 : vector<2x16xf32>
    %c3_31 = arith.constant 3 : index
    %57 = memref.load %arg3[%c3_31] : memref<4xf32, #tpu.memory_space<smem>>
    %58 = vector.broadcast %57 : f32 to vector<2x16xf32>
    %59 = arith.addf %56, %58 : vector<2x16xf32>
    %c3_32 = arith.constant 3 : index
    %c1_33 = arith.constant 1 : index
    %60 = memref.load %arg2[%c3_32, %c1_33] : memref<4x3xf32, #tpu.memory_space<smem>>
    %61 = vector.broadcast %60 : f32 to vector<2x16xf32>
    %62 = arith.mulf %61, %1 : vector<2x16xf32>
    %63 = arith.addf %59, %62 : vector<2x16xf32>
    %c3_34 = arith.constant 3 : index
    %c2_35 = arith.constant 2 : index
    %64 = memref.load %arg2[%c3_34, %c2_35] : memref<4x3xf32, #tpu.memory_space<smem>>
    %65 = vector.broadcast %64 : f32 to vector<2x16xf32>
    %66 = arith.mulf %65, %2 : vector<2x16xf32>
    %67 = arith.addf %63, %66 : vector<2x16xf32>
    %cst_36 = arith.constant 0.000000e+00 : f32
    %68 = vector.broadcast %cst_36 : f32 to vector<2x16xf32>
    %69 = arith.maximumf %67, %68 : vector<2x16xf32>
    %c0_37 = arith.constant 0 : index
    %c48 = arith.constant 48 : index
    %70 = vector.load %arg4[%c0_37, %c48] : memref<2x64xf32, #tpu.memory_space<vmem>>, vector<2x16xf32>
    tpu.vector_store %arg4[%c0_37, %c48], %69 {strides = array<i32>} : memref<2x64xf32, #tpu.memory_space<vmem>>, vector<2x16xf32>,
    return
  }
  func.func @transform_0(%arg0: i32) -> (i32, i32) {
    %c0_i32 = arith.constant 0 : i32
    %c0_i32_0 = arith.constant 0 : i32
    return %arg0, %c0_i32 : i32, i32
  }
  func.func @transform_1(%arg0: i32) -> (i32, i32) {
    %c0_i32 = arith.constant 0 : i32
    %c0_i32_0 = arith.constant 0 : i32
    %c0_i32_1 = arith.constant 0 : i32
    return %c0_i32, %c0_i32_0 : i32, i32
  }
  func.func @transform_2(%arg0: i32) -> i32 {
    %c0_i32 = arith.constant 0 : i32
    %c0_i32_0 = arith.constant 0 : i32
    return %c0_i32 : i32
  }
  func.func @transform_3(%arg0: i32) -> (i32, i32) {
    %c0_i32 = arith.constant 0 : i32
    %c0_i32_0 = arith.constant 0 : i32
    return %arg0, %c0_i32 : i32, i32
  }
}

</mosaic_0001>

<llo_original>
// kernel: tpu_custom_call.1
$region0: #{tpu_custom_call.1}
  #allocation0 [shape = 'u32[]', space=smem, size = 0x4, offset = 0x4, fixed_abs, tag = 'smem constant byte address 0x4 - core index']
  #allocation1 [shape = 'u32[144,128]{1,0:T(1,128)}', space=vmem, size = 0x12000, scoped, tag = 'internal scratch']
  %s0 = inlined_call_operand.hbm [shape: f32[2,18], index: 0, kind: input, shape index: {}]
  %s1 = inlined_call_operand.hbm [shape: f32[4,3], index: 1, kind: input, shape index: {}]
  %s2 = inlined_call_operand.vmem [shape: f32[4], index: 2, kind: input, shape index: {}]
  %s3 = inlined_call_operand.hbm [shape: f32[2,64], index: 3, kind: output, shape index: {}]
  %s4 = sld [smem:[#allocation0]]
  $region34: #{tpu_custom_call.1} parent=0
    _
  %s6 = ssub.s32 1, %s4
  %s7 = scalar_select 0, %s6, %s4
  $region1: #{tpu_custom_call.1} parent=0
    #allocation2 [shape = 'u8[1024]{0}', space=vmem, size = 0x400, scoped, tag = 'input window, operand 0, single buffered']
    #allocation3 [shape = 's32[1]{0}', space=sflag, size = 0x4, scoped, tag = 'scoped memory for tpu_custom_call.1']
    #allocation4 [shape = 's32[1]{0}', space=sflag, size = 0x4, scoped, tag = 'scoped memory for tpu_custom_call.1']
    #allocation5 [shape = 's32[1]{0}', space=sflag, size = 0x4, scoped, tag = 'scoped memory for tpu_custom_call.1']
    #allocation6 [shape = 's32[1]{0}', space=sflag, size = 0x4, scoped, tag = 'scoped memory for tpu_custom_call.1']
    #allocation7 [shape = 'u8[2048]{0}', space=smem, size = 0x800, scoped, tag = 'input window, operand 1, single buffered']
    #allocation8 [shape = 'u8[512]{0}', space=smem, size = 0x200, scoped, tag = 'input window, operand 2, single buffered']
    #allocation9 [shape = 'u8[1024]{0}', space=vmem, size = 0x400, scoped, tag = 'output window, operand 0, single buffered']
    %8 = vsyncpa [#allocation3], 0
    %9 = vsyncpa [#allocation5], 0
    %10 = vsyncpa [#allocation6], 0
    %11 = vsyncpa [#allocation4], 0
    // Predicated region
    $region2: #{tpu_custom_call.1} parent=1 // pred_check
      _
    $region3: #{tpu_custom_call.1} parent=1 // pred_check_branch
      %13 = sbr.rel (0) target = $region5
    $region4: #{tpu_custom_call.1} parent=1 // pred_region
      %s15 = ssub.s32 32, 32
      %16 = vsyncadd [#allocation3], %s15
      %s18 = sshll.u32 [#allocation2], 4
      %s19 = int_to_ptr.vmem [resolvable:$true] %s18
      %21 = dma.hbm_to_vmem [thread:$0]  %s0, 32, %s19, [#allocation3]
    $region5: #{tpu_custom_call.1} parent=1 // pred_fallthru
      _
    // Predicated region
    $region6: #{tpu_custom_call.1} parent=1 // pred_check
      _
    $region7: #{tpu_custom_call.1} parent=1 // pred_check_branch
      %23 = sbr.rel (0) target = $region9
    $region8: #{tpu_custom_call.1} parent=1 // pred_region
      %s25 = ssub.s32 64, 64
      %26 = vsyncadd [#allocation5], %s25
      %29 = dma.hbm_to_smem %s1, 64, [#allocation7], [#allocation5]
    $region9: #{tpu_custom_call.1} parent=1 // pred_fallthru
      _
    // Predicated region
    $region10: #{tpu_custom_call.1} parent=1 // pred_check
      _
    $region11: #{tpu_custom_call.1} parent=1 // pred_check_branch
      %31 = sbr.rel (0) target = $region13
    $region12: #{tpu_custom_call.1} parent=1 // pred_region
      %s33 = ssub.s32 16, 16
      %34 = vsyncadd [#allocation6], %s33
      %s36 = sshll.u32 %s2, 4
      %s37 = int_to_ptr.vmem [resolvable:$true] %s36
      %39 = dma.vmem_to_smem %s37, 16, [#allocation8], [#allocation6]
    $region13: #{tpu_custom_call.1} parent=1 // pred_fallthru
      _
    // Predicated region
    $region14: #{tpu_custom_call.1} parent=1 // pred_check
      _
    $region15: #{tpu_custom_call.1} parent=1 // pred_check_branch
      %41 = sbr.rel (0) target = $region17
    $region16: #{tpu_custom_call.1} parent=1 // pred_region
      %42 = dma.done [#allocation3], 32
    $region17: #{tpu_custom_call.1} parent=1 // pred_fallthru
      _
    // Predicated region
    $region18: #{tpu_custom_call.1} parent=1 // pred_check
      _
    $region19: #{tpu_custom_call.1} parent=1 // pred_check_branch
      %44 = sbr.rel (0) target = $region21
    $region20: #{tpu_custom_call.1} parent=1 // pred_region
      %45 = dma.done [#allocation5], 64
    $region21: #{tpu_custom_call.1} parent=1 // pred_fallthru
      _
    // Predicated region
    $region22: #{tpu_custom_call.1} parent=1 // pred_check
      _
    $region23: #{tpu_custom_call.1} parent=1 // pred_check_branch
      %47 = sbr.rel (0) target = $region25
    $region24: #{tpu_custom_call.1} parent=1 // pred_region
      %48 = dma.done [#allocation6], 16
    $region25: #{tpu_custom_call.1} parent=1 // pred_fallthru
      _
    %49 = sfence
    %v50 = vld [vmem:[#allocation2] sm:$0x3]
    %s51 = sld [smem:[#allocation7]]
    %v52 = vstv %s51
    %v53 = vmul.f32 %v50, %v52
    %s54 = sld [smem:[#allocation8]]
    %v55 = vstv %s54
    %v56 = vadd.f32 %v53, %v55
    %s57 = sld [smem:[#allocation7 + $0x1]]
    %v58 = vstv %s57
    %v59 = vmul.f32 %v58, %v50
    %61 = vrot.lane.b32.xlu0 %v59, 127
    %v62 = vpop.permute.xlu0 %61
    %v64 = vadd.f32 %v56, %v62
    %s65 = sld [smem:[#allocation7 + $0x2]]
    %v66 = vstv %s65
    %v67 = vmul.f32 %v66, %v50
    %69 = vrot.lane.b32.xlu0 %v67, 126
    %v70 = vpop.permute.xlu0 %69
    %v72 = vadd.f32 %v64, %v70
    %v73 = vmax.f32 %v72, 0.0
    %vm74 = vcmask 123904
    %75 = vst.msk [vmem:[#allocation9] sm:$0x3] %vm74, %v73
    %s76 = sld [smem:[#allocation7 + $0x80]]
    %v77 = vstv %s76
    %v78 = vmul.f32 %v50, %v77
    %s79 = sld [smem:[#allocation8 + $0x1]]
    %v80 = vstv %s79
    %v81 = vadd.f32 %v78, %v80
    %s82 = sld [smem:[#allocation7 + $0x81]]
    %v83 = vstv %s82
    %v84 = vmul.f32 %v83, %v50
    %86 = vrot.lane.b32.xlu0 %v84, 127
    %v87 = vpop.permute.xlu0 %86
    %v89 = vadd.f32 %v81, %v87
    %s90 = sld [smem:[#allocation7 + $0x82]]
    %v91 = vstv %s90
    %v92 = vmul.f32 %v91, %v50
    %94 = vrot.lane.b32.xlu0 %v92, 126
    %v95 = vpop.permute.xlu0 %94
    %v97 = vadd.f32 %v89, %v95
    %v98 = vmax.f32 %v97, 0.0
    %100 = vrot.lane.b32.xlu0 %v98, 16
    %v101 = vpop.permute.xlu0 %100
    %vm103 = vcmask 255104
    %104 = vst.msk [vmem:[#allocation9] sm:$0x3] %vm103, %v101
    %s105 = sld [smem:[#allocation7 + $0x100]]
    %v106 = vstv %s105
    %v107 = vmul.f32 %v50, %v106
    %s108 = sld [smem:[#allocation8 + $0x2]]
    %v109 = vstv %s108
    %v110 = vadd.f32 %v107, %v109
    %s111 = sld [smem:[#allocation7 + $0x101]]
    %v112 = vstv %s111
    %v113 = vmul.f32 %v112, %v50
    %115 = vrot.lane.b32.xlu0 %v113, 127
    %v116 = vpop.permute.xlu0 %115
    %v118 = vadd.f32 %v110, %v116
    %s119 = sld [smem:[#allocation7 + $0x102]]
    %v120 = vstv %s119
    %v121 = vmul.f32 %v120, %v50
    %123 = vrot.lane.b32.xlu0 %v121, 126
    %v124 = vpop.permute.xlu0 %123
    %v126 = vadd.f32 %v118, %v124
    %v127 = vmax.f32 %v126, 0.0
    %129 = vrot.lane.b32.xlu0 %v127, 32
    %v130 = vpop.permute.xlu0 %129
    %vm132 = vcmask 386304
    %133 = vst.msk [vmem:[#allocation9] sm:$0x3] %vm132, %v130
    %s134 = sld [smem:[#allocation7 + $0x180]]
    %v135 = vstv %s134
    %v136 = vmul.f32 %v50, %v135
    %s137 = sld [smem:[#allocation8 + $0x3]]
    %v138 = vstv %s137
    %v139 = vadd.f32 %v136, %v138
    %s140 = sld [smem:[#allocation7 + $0x181]]
    %v141 = vstv %s140
    %v142 = vmul.f32 %v141, %v50
    %144 = vrot.lane.b32.xlu0 %v142, 127
    %v145 = vpop.permute.xlu0 %144
    %v147 = vadd.f32 %v139, %v145
    %s148 = sld [smem:[#allocation7 + $0x182]]
    %v149 = vstv %s148
    %v150 = vmul.f32 %v149, %v50
    %152 = vrot.lane.b32.xlu0 %v150, 126
    %v153 = vpop.permute.xlu0 %152
    %v155 = vadd.f32 %v147, %v153
    %v156 = vmax.f32 %v155, 0.0
    %158 = vrot.lane.b32.xlu0 %v156, 48
    %v159 = vpop.permute.xlu0 %158
    %vm161 = vcmask 517504
    %162 = vst.msk [vmem:[#allocation9] sm:$0x3] %vm161, %v159
    // Predicated region
    $region26: #{tpu_custom_call.1} parent=1 // pred_check
      _
    $region27: #{tpu_custom_call.1} parent=1 // pred_check_branch
      %164 = sbr.rel (0) target = $region29
    $region28: #{tpu_custom_call.1} parent=1 // pred_region
      %s166 = ssub.s32 32, 32
      %167 = vsyncadd [#allocation4], %s166
      %s169 = sshll.u32 [#allocation9], 4
      %s170 = int_to_ptr.vmem [resolvable:$true] %s169
      %172 = dma.vmem_to_hbm [thread:$0]  %s170, 32, %s3, [#allocation4]
    $region29: #{tpu_custom_call.1} parent=1 // pred_fallthru
      _
    // Predicated region
    $region30: #{tpu_custom_call.1} parent=1 // pred_check
      _
    $region31: #{tpu_custom_call.1} parent=1 // pred_check_branch
      %174 = sbr.rel (0) target = $region33
    $region32: #{tpu_custom_call.1} parent=1 // pred_region
      %175 = dma.done [#allocation4], 32
    $region33: #{tpu_custom_call.1} parent=1 // pred_fallthru
      _
    %176 = vsyncpa [#allocation3], 1
    %177 = vsyncpa [#allocation4], 1
    %178 = vsyncpa [#allocation5], 1
    %179 = vsyncpa [#allocation6], 1

</llo_original>
